<compile_context>
chip_gen: v7x
topology: tpu7x:2x2x1
jax: 0.10.0
libtpu: 0.0.40
codegen_flags: <defaults>
</compile_context>

<pallas_src>
import jax
import jax.numpy as jnp
from jax.experimental import pallas as pl
from jax.experimental.pallas import tpu as pltpu


def _cancelout_kernel(x_ref, w_ref, o_ref):
    # x_ref: (block_b, block_f) tile of the input
    # w_ref: (1, block_f)       per-feature weights (resident over the batch loop)
    gate = jax.nn.sigmoid(w_ref[...].astype(jnp.float32)).astype(x_ref.dtype)  # EUP
    o_ref[...] = x_ref[...] * gate  # sublane-broadcast multiply on the VPU


def _round_down(v: int, m: int) -> int:
    return (v // m) * m


def _tpu_budget() -> tuple[int, int]:
    """(target_tile_bytes, vmem_limit_bytes) per TPU generation."""
    try:
        info = pltpu.get_tpu_info()
        vmem_cap = int(getattr(info, "vmem_capacity_bytes", 64 << 20))
    except Exception:
        vmem_cap = 64 << 20  # conservative (v7x-sized) fallback
    if vmem_cap <= (64 << 20):
        # v7x: 64 MiB VMEM per TensorCore -> keep tiles modest, cap the limit.
        return 2 << 20, 48 << 20
    # v5e / v6e: 128 MiB VMEM -> bigger tiles amortize per-grid-step overhead.
    return 6 << 20, 64 << 20


def cancelout(
    x: jax.Array,
    weights: jax.Array,
    *,
    block_b: int | None = None,
    block_f: int | None = None,
) -> jax.Array:
    """y = x * sigmoid(weights.float()), weights broadcast over the batch dim."""
    assert x.ndim == 2, "expected x as [batch, input_size]"
    B, F = x.shape
    assert weights.shape == (F,)

    dtype_bytes = jnp.dtype(x.dtype).itemsize
    # Rows per fully packed vreg: f32 -> 8, bf16 -> 16, int8 -> 32.
    sublane_mult = max(8, 32 // dtype_bytes)

    target_tile_bytes, vmem_limit_bytes = _tpu_budget()

    # --- lane padding: keep the feature (lane) axis a multiple of 128 --------
    F_pad = ((F + 127) // 128) * 128 if F % 128 != 0 else F
    if F_pad != F:
        x_in = jnp.pad(x, ((0, 0), (0, F_pad - F)))
        w_in = jnp.pad(weights, (0, F_pad - F))
    else:
        x_in, w_in = x, weights
    w2d = w_in.reshape(1, F_pad)

    # --- feature-axis tile (multiple of 128) ----------------------------------
    if block_f is None:
        max_lanes = max(
            128, _round_down(target_tile_bytes // (sublane_mult * dtype_bytes), 128)
        )
        block_f = min(F_pad, max_lanes)
    block_f = min(block_f, F_pad)
    if block_f % 128 != 0:
        block_f = F_pad

    # --- batch-axis tile (dtype-aware sublane rounding) ------------------------
    if block_b is None:
        rows = target_tile_bytes // max(1, block_f * dtype_bytes)
        rows = min(rows, B)
        rows = _round_down(rows, sublane_mult)
        block_b = B if B <= sublane_mult else max(sublane_mult, rows)
    block_b = min(block_b, B)
    if block_b != B and block_b % sublane_mult != 0:
        bb = _round_down(block_b, sublane_mult)
        block_b = bb if bb >= sublane_mult else B  # full extent is always legal

    num_b = pl.cdiv(B, block_b)
    num_f = pl.cdiv(F_pad, block_f)

    # --- guarantee a multi-step grid for non-tiny inputs ----------------------
    # (enables double-buffered DMA overlap everywhere; lets v7x shard tiles
    #  across both TensorCores instead of leaving one idle)
    total_bytes = B * F_pad * dtype_bytes
    want_tiles = 4 if total_bytes >= (8 << 20) else (2 if total_bytes >= (2 << 20) else 1)
    if num_b * num_f < want_tiles and B > sublane_mult:
        needed_b_tiles = pl.cdiv(want_tiles, num_f)
        bb = max(sublane_mult, _round_down(pl.cdiv(B, needed_b_tiles), sublane_mult))
        if bb < block_b:
            block_b = bb
            num_b = pl.cdiv(B, block_b)

    grid = (num_f, num_b)  # feature tiles outer -> weight block resident over batch loop

    w_bytes = jnp.dtype(weights.dtype).itemsize
    cost = pl.CostEstimate(
        flops=B * F_pad,                          # one multiply per element
        transcendentals=num_b * F_pad,            # gate recomputed once per grid step
        bytes_accessed=2 * B * F_pad * dtype_bytes + F_pad * w_bytes,
    )

    # TODO(synk): torch type-promotes a bf16 x to an f32 output; here the output
    # keeps x.dtype (gate is still computed in f32).  Numerically close, not bit-parity.
    out = pl.pallas_call(
        _cancelout_kernel,
        out_shape=jax.ShapeDtypeStruct((B, F_pad), x.dtype),
        grid_spec=pltpu.PrefetchScalarGridSpec(
            num_scalar_prefetch=0,
            grid=grid,
            in_specs=[
                pl.BlockSpec((block_b, block_f), lambda f, b: (b, f)),
                pl.BlockSpec((1, block_f), lambda f, b: (0, f)),
            ],
            out_specs=pl.BlockSpec((block_b, block_f), lambda f, b: (b, f)),
        ),
        compiler_params=pltpu.CompilerParams(
            # Pure elementwise: every grid step writes a distinct output tile.
            dimension_semantics=("parallel", "parallel"),
            vmem_limit_bytes=vmem_limit_bytes,
        ),
        cost_estimate=cost,
    )(x_in, w2d)

    return out[:, :F] if F_pad != F else out


if __name__ == "__main__":
    key = jax.random.PRNGKey(0)
    k1, k2 = jax.random.split(key)

    # 1) Typical CancelOut shape: feature count NOT a multiple of 128 -> lane-padded path.
    B, F = 32, 77
    x = jax.random.normal(k1, (B, F), dtype=jnp.float32)
    w = jnp.linspace(-2.0, 2.0, F, dtype=jnp.float32)
    y = jax.block_until_ready(cancelout(x, w))
    y_ref = x * jax.nn.sigmoid(w)[None, :]
    assert y.shape == x.shape and y.dtype == x.dtype
    assert jnp.allclose(y, y_ref, atol=1e-6, rtol=1e-6)

    # 2) Lane-dense, explicitly tiled path (grid = (2 feature tiles, 2 batch tiles)).
    B2, F2 = 32, 256
    x2 = jax.random.normal(k2, (B2, F2), dtype=jnp.float32)
    w2 = jnp.linspace(-3.0, 3.0, F2, dtype=jnp.float32)
    y2 = jax.block_until_ready(cancelout(x2, w2, block_b=16, block_f=128))
    y2_ref = x2 * jax.nn.sigmoid(w2)[None, :]
    assert jnp.allclose(y2, y2_ref, atol=1e-6, rtol=1e-6)

    # 3) bf16 input (gate computed in f32, multiply in bf16; 16-row sublane rounding).
    xb = x2.astype(jnp.bfloat16)
    yb = jax.block_until_ready(cancelout(xb, w2))
    yb_ref = xb * jax.nn.sigmoid(w2).astype(jnp.bfloat16)[None, :]
    assert yb.dtype == jnp.bfloat16
    assert jnp.allclose(
        yb.astype(jnp.float32), yb_ref.astype(jnp.float32), atol=1e-2, rtol=1e-2
    )

    print("KERNEL_OK")
</pallas_src>

<mosaic_0001>
module attributes {stable_mosaic.version = 11 : i64} {
  func.func @_cancelout_kernel(%arg0: i32, %arg1: i32, %arg2: memref<32x128xf32, #tpu.memory_space<vmem>>, %arg3: memref<1x128xf32, #tpu.memory_space<vmem>>, %arg4: memref<32x128xf32, #tpu.memory_space<vmem>>) attributes {dimension_semantics = [#tpu.dimension_semantics<parallel>, #tpu.dimension_semantics<parallel>], iteration_bounds = array<i64: 1, 1>, scalar_prefetch = 0 : i64, scratch_operands = 0 : i64, tpu.core_type = #tpu.core_type<tc>, window_params = [{transform_indices = @transform_0, window_bounds = array<i64: 32, 128>}, {transform_indices = @transform_1, window_bounds = array<i64: 1, 128>}, {transform_indices = @transform_2, window_bounds = array<i64: 32, 128>}]} {
    %c0 = arith.constant 0 : index
    %c0_0 = arith.constant 0 : index
    %0 = vector.load %arg3[%c0, %c0_0] : memref<1x128xf32, #tpu.memory_space<vmem>>, vector<1x128xf32>
    %1 = arith.negf %0 : vector<1x128xf32>
    %2 = math.exp %1 : vector<1x128xf32>
    %cst = arith.constant 1.000000e+00 : f32
    %3 = vector.broadcast %cst : f32 to vector<1x128xf32>
    %4 = arith.addf %3, %2 : vector<1x128xf32>
    %5 = arith.divf %3, %4 : vector<1x128xf32>
    %c0_1 = arith.constant 0 : index
    %c0_2 = arith.constant 0 : index
    %6 = vector.load %arg2[%c0_1, %c0_2] : memref<32x128xf32, #tpu.memory_space<vmem>>, vector<32x128xf32>
    %7 = vector.broadcast %5 : vector<1x128xf32> to vector<32x128xf32>
    %8 = arith.mulf %6, %7 : vector<32x128xf32>
    %c0_3 = arith.constant 0 : index
    %c0_4 = arith.constant 0 : index
    %9 = vector.load %arg4[%c0_3, %c0_4] : memref<32x128xf32, #tpu.memory_space<vmem>>, vector<32x128xf32>
    tpu.vector_store %arg4[%c0_3, %c0_4], %8 {strides = array<i32>} : memref<32x128xf32, #tpu.memory_space<vmem>>, vector<32x128xf32>,
    return
  }
  func.func @transform_0(%arg0: i32, %arg1: i32) -> (i32, i32) {
    %c0_i32 = arith.constant 0 : i32
    return %arg1, %arg0 : i32, i32
  }
  func.func @transform_1(%arg0: i32, %arg1: i32) -> (i32, i32) {
    %c0_i32 = arith.constant 0 : i32
    %c0_i32_0 = arith.constant 0 : i32
    return %c0_i32, %arg0 : i32, i32
  }
  func.func @transform_2(%arg0: i32, %arg1: i32) -> (i32, i32) {
    %c0_i32 = arith.constant 0 : i32
    return %arg1, %arg0 : i32, i32
  }
}

</mosaic_0001>

<llo_original>
// kernel: tpu_custom_call.1
$region0: #{tpu_custom_call.1}
  #allocation0 [shape = 'u32[]', space=smem, size = 0x4, offset = 0x4, fixed_abs, tag = 'smem constant byte address 0x4 - core index']
  #allocation1 [shape = 'u32[144,128]{1,0:T(1,128)}', space=vmem, size = 0x12000, scoped, tag = 'internal scratch']
  %s0 = inlined_call_operand.hbm [shape: f32[32,128], index: 0, kind: input, shape index: {}]
  %s1 = inlined_call_operand.vmem [shape: f32[1,128], index: 1, kind: input, shape index: {}]
  %s2 = inlined_call_operand.hbm [shape: f32[32,128], index: 2, kind: output, shape index: {}]
  %s3 = sld [smem:[#allocation0]]
  $region22: #{tpu_custom_call.1} parent=0
    _
  %s5 = ssub.s32 1, %s3
  %s6 = scalar_select 0, %s5, %s3
  $region1: #{tpu_custom_call.1} parent=0
    #allocation2 [shape = 'u8[16384]{0}', space=vmem, size = 0x4000, scoped, tag = 'input window, operand 0, single buffered']
    #allocation3 [shape = 's32[1]{0}', space=sflag, size = 0x4, scoped, tag = 'scoped memory for tpu_custom_call.1']
    #allocation4 [shape = 's32[1]{0}', space=sflag, size = 0x4, scoped, tag = 'scoped memory for tpu_custom_call.1']
    #allocation5 [shape = 'u8[16384]{0}', space=vmem, size = 0x4000, scoped, tag = 'output window, operand 0, single buffered']
    %7 = vsyncpa [#allocation3], 0
    %8 = vsyncpa [#allocation4], 0
    // Predicated region
    $region2: #{tpu_custom_call.1} parent=1 // pred_check
      _
    $region3: #{tpu_custom_call.1} parent=1 // pred_check_branch
      %10 = sbr.rel (0) target = $region5
    $region4: #{tpu_custom_call.1} parent=1 // pred_region
      %s12 = ssub.s32 512, 512
      %13 = vsyncadd [#allocation3], %s12
      %s14 = sshll.u32 [#allocation2], 4
      %s15 = int_to_ptr.vmem [resolvable:$true] %s14
      %20 = dma.hbm_to_vmem [thread:$0]  %s0, 512, %s15, [#allocation3], 128, 128, 8
    $region5: #{tpu_custom_call.1} parent=1 // pred_fallthru
      _
    // Predicated region
    $region6: #{tpu_custom_call.1} parent=1 // pred_check
      _
    $region7: #{tpu_custom_call.1} parent=1 // pred_check_branch
      %22 = sbr.rel (0) target = $region9
    $region8: #{tpu_custom_call.1} parent=1 // pred_region
      _
    $region9: #{tpu_custom_call.1} parent=1 // pred_fallthru
      _
    // Predicated region
    $region10: #{tpu_custom_call.1} parent=1 // pred_check
      _
    $region11: #{tpu_custom_call.1} parent=1 // pred_check_branch
      %24 = sbr.rel (0) target = $region13
    $region12: #{tpu_custom_call.1} parent=1 // pred_region
      %25 = dma.done [#allocation3], 512
    $region13: #{tpu_custom_call.1} parent=1 // pred_fallthru
      _
    %v26 = vld [vmem:[%s1] sm:$0x1]
    %v27 = vxor.u32 %v26, 2147483648
    %v28 = vmul.f32 %v27, 1.442695
    %v29 = vpow.pop %v28
    %v30 = vadd.f32 %v29, 1.0
    %v31 = vrcp.pop %v30
    %v32 = vmul.f32 1.0, %v31
    %v33 = vld [vmem:[#allocation2] sm:$0xff]
    %v34 = vld [vmem:[#allocation2 + $0x8] sm:$0xff]
    %v35 = vld [vmem:[#allocation2 + $0x10] sm:$0xff]
    %v36 = vld [vmem:[#allocation2 + $0x18] sm:$0xff]
    %v38 = vlaneseq
    %v39 = vshrl.u32 %v38, 7
    %v40 = vsub.s32 0, %v39
    %v41 = vrot.slane %v32, %v40
    %v43 = vmul.f32 %v33, %v41
    %v44 = vmul.f32 %v34, %v41
    %v45 = vmul.f32 %v35, %v41
    %v46 = vmul.f32 %v36, %v41
    %47 = vst [vmem:[#allocation5] sm:$0xff] %v43
    %48 = vst [vmem:[#allocation5 + $0x8] sm:$0xff] %v44
    %49 = vst [vmem:[#allocation5 + $0x10] sm:$0xff] %v45
    %50 = vst [vmem:[#allocation5 + $0x18] sm:$0xff] %v46
    // Predicated region
    $region14: #{tpu_custom_call.1} parent=1 // pred_check
      _
    $region15: #{tpu_custom_call.1} parent=1 // pred_check_branch
      %52 = sbr.rel (0) target = $region17
    $region16: #{tpu_custom_call.1} parent=1 // pred_region
      %s54 = ssub.s32 512, 512
      %55 = vsyncadd [#allocation4], %s54
      %s56 = sshll.u32 [#allocation5], 4
      %s57 = int_to_ptr.vmem [resolvable:$true] %s56
      %62 = dma.vmem_to_hbm [thread:$0]  %s57, 512, %s2, [#allocation4], 128, 128, 8
    $region17: #{tpu_custom_call.1} parent=1 // pred_fallthru
      _
    // Predicated region
    $region18: #{tpu_custom_call.1} parent=1 // pred_check
      _
    $region19: #{tpu_custom_call.1} parent=1 // pred_check_branch
      %64 = sbr.rel (0) target = $region21
    $region20: #{tpu_custom_call.1} parent=1 // pred_region
      %65 = dma.done [#allocation4], 512
    $region21: #{tpu_custom_call.1} parent=1 // pred_fallthru
      _
    %66 = vsyncpa [#allocation3], 1
    %67 = vsyncpa [#allocation4], 1

</llo_original>
